<compile_context>
chip_gen: v7x
topology: tpu7x:2x2x1
jax: 0.10.0
libtpu: 0.0.40
codegen_flags: <defaults>
</compile_context>

<pallas_src>
import math
import functools

import jax
import jax.numpy as jnp
from jax.experimental import pallas as pl
from jax.experimental.pallas import tpu as pltpu


# ----------------------------------------------------------------------------
# Pallas kernels
# ----------------------------------------------------------------------------
def _conv3x3_kernel(x_ref, w_ref, b_ref, o_ref, *, H, W, relu):
    """Fused-im2col 3x3 conv (single big MXU matmul).

    x_ref: (1, H+2, W+2, Cin)  bf16 padded tile
    w_ref: (9*Cin, Cout)       bf16, K ordered as (kh, kw, c)
    b_ref: (1, Cout)           f32
    o_ref: (1, H*W, Cout)      bf16 (flat spatial -> no output relayout)
    """
    xfull = x_ref[0]
    Cin = xfull.shape[-1]
    taps = []
    for kh in range(3):
        for kw in range(3):
            taps.append(jax.lax.slice(xfull, (kh, kw, 0), (kh + H, kw + W, Cin)))
    # (H, W, 9*Cin) -> (H*W, 9*Cin): one concat + one reshape, one matmul.
    im2col = jnp.concatenate(taps, axis=-1).reshape(H * W, 9 * Cin)
    acc = jnp.dot(im2col, w_ref[...], preferred_element_type=jnp.float32)
    acc = acc + b_ref[...]
    if relu:
        acc = jnp.maximum(acc, 0.0)
    o_ref[0] = acc.astype(o_ref.dtype)


def _dense_kernel(x_ref, w_ref, b_ref, o_ref, *, relu):
    """Row-tiled dense: (TM, K) @ (K, N) + b."""
    acc = jnp.dot(x_ref[...], w_ref[...], preferred_element_type=jnp.float32)
    acc = acc + b_ref[...]
    if relu:
        acc = jnp.maximum(acc, 0.0)
    o_ref[...] = acc.astype(o_ref.dtype)


def _meta_kernel(x_ref, lw_ref, o_ref, *, H, W):
    """Fused unfold + per-pixel dot (MetaSR upsample), lane-dense output.

    x_ref : (1, H+2, W+2, G)  bf16 padded feature map (shared across s^2)
    lw_ref: (9, H, W, G)      bf16 per-(subpixel, tap) local weights
    o_ref : (1, 1, H, W)      f32
    """
    xfull = x_ref[0]
    G = xfull.shape[-1]
    acc = jnp.zeros((H, W, G), jnp.float32)
    for kh in range(3):
        for kw in range(3):
            xs = jax.lax.slice(xfull, (kh, kw, 0), (kh + H, kw + W, G))
            lwt = lw_ref[kh * 3 + kw]
            acc = acc + xs.astype(jnp.float32) * lwt.astype(jnp.float32)
    o_ref[0, 0] = jnp.sum(acc, axis=-1)


# ----------------------------------------------------------------------------
# Pallas wrappers
# ----------------------------------------------------------------------------
def conv3x3(x, w, b, relu=False):
    """x: (N,H,W,Cin) float; w: (3,3,Cin,Cout); b: (Cout,) -> (N,H,W,Cout) bf16."""
    N, H, W, Cin = x.shape
    Cout = w.shape[-1]
    xp = jnp.pad(x.astype(jnp.bfloat16), ((0, 0), (1, 1), (1, 1), (0, 0)))
    wf = w.reshape(9 * Cin, Cout).astype(jnp.bfloat16)   # (kh,kw,c) flattened K
    bf = b.reshape(1, Cout).astype(jnp.float32)
    # TODO(synk): add halo-aware spatial row tiling (manual DMA) for very large
    # H*W on v7x (64 MiB VMEM); whole-image-per-batch blocks are fine here.
    out = pl.pallas_call(
        functools.partial(_conv3x3_kernel, H=H, W=W, relu=relu),
        out_shape=jax.ShapeDtypeStruct((N, H * W, Cout), jnp.bfloat16),
        grid=(N,),
        in_specs=[
            pl.BlockSpec((1, H + 2, W + 2, Cin), lambda n: (n, 0, 0, 0)),
            pl.BlockSpec((9 * Cin, Cout), lambda n: (0, 0)),
            pl.BlockSpec((1, Cout), lambda n: (0, 0)),
        ],
        out_specs=pl.BlockSpec((1, H * W, Cout), lambda n: (n, 0, 0)),
        compiler_params=pltpu.CompilerParams(
            dimension_semantics=("parallel",)),
    )(xp, wf, bf)
    return out.reshape(N, H, W, Cout)


def dense(x, w, b, relu=False, out_dtype=jnp.bfloat16, tm=1024):
    """x: (M,K), w: (K,N), b: (N,) -> (M,N). Row-tiled over M."""
    M, K = x.shape
    Nc = w.shape[-1]
    TM = min(tm, M)
    Mp = pl.cdiv(M, TM) * TM
    xb = x.astype(jnp.bfloat16)
    if Mp != M:
        xb = jnp.pad(xb, ((0, Mp - M), (0, 0)))
    out = pl.pallas_call(
        functools.partial(_dense_kernel, relu=relu),
        out_shape=jax.ShapeDtypeStruct((Mp, Nc), out_dtype),
        grid=(Mp // TM,),
        in_specs=[
            pl.BlockSpec((TM, K), lambda i: (i, 0)),
            pl.BlockSpec((K, Nc), lambda i: (0, 0)),
            pl.BlockSpec((1, Nc), lambda i: (0, 0)),
        ],
        out_specs=pl.BlockSpec((TM, Nc), lambda i: (i, 0)),
        compiler_params=pltpu.CompilerParams(
            dimension_semantics=("parallel",)),
    )(xb, w.astype(jnp.bfloat16), b.reshape(1, Nc).astype(jnp.float32))
    return out[:M]


def conv1x1(x, w, b, relu=False):
    N, H, W, Cin = x.shape
    Cout = w.shape[-1]
    y = dense(x.reshape(N * H * W, Cin), w, b, relu=relu)
    return y.reshape(N, H, W, Cout)


def meta_upsample(x, lw, s):
    """Fused MetaSR tail: unfold(up_x, 3, pad=1) . local_weight.

    x : (N, H, W, G) feature map (repeat_x is implicit: the same feature-map
        block is reused for all s^2 sub-pixel positions via the index_map).
    lw: (P, 9*G) Pos2Weight output, P = (H*s)*(W*s) row-major over the
        upsampled grid, K ordered as c*9 + kh*3 + kw (torch unfold ordering).
    Returns (N, s*s, H, W) f32 with the s^2 axis ordered (si_h, si_w).
    """
    N, H, W, G = x.shape
    s2 = s * s
    xp = jnp.pad(x.astype(jnp.bfloat16), ((0, 0), (1, 1), (1, 1), (0, 0)))
    # (P, 9G) -> (h, si_h, w, si_w, c, kh, kw) -> (si_h, si_w, kh, kw, h, w, c)
    lw_r = lw.reshape(H, s, W, s, G, 3, 3)
    lw_r = jnp.transpose(lw_r, (1, 3, 5, 6, 0, 2, 4))
    lw_r = lw_r.reshape(s2 * 9, H, W, G).astype(jnp.bfloat16)
    return pl.pallas_call(
        functools.partial(_meta_kernel, H=H, W=W),
        out_shape=jax.ShapeDtypeStruct((N, s2, H, W), jnp.float32),
        grid=(N, s2),
        in_specs=[
            # constant across the si axis -> block stays resident in VMEM
            pl.BlockSpec((1, H + 2, W + 2, G), lambda n, si: (n, 0, 0, 0)),
            pl.BlockSpec((9, H, W, G), lambda n, si: (si, 0, 0, 0)),
        ],
        out_specs=pl.BlockSpec((1, 1, H, W), lambda n, si: (n, si, 0, 0)),
        compiler_params=pltpu.CompilerParams(
            dimension_semantics=("parallel", "arbitrary")),
    )(xp, lw_r)


# ----------------------------------------------------------------------------
# Parameters (deterministic synthetic init; shapes follow MetaRDN.__init__)
# ----------------------------------------------------------------------------
def init_params(key, D, C, G):
    params = {}
    keys = [key]

    def nxt():
        keys[0], sub = jax.random.split(keys[0])
        return sub

    def conv_w(cin, cout, k=3):
        std = 1.0 / math.sqrt(k * k * cin)
        return jax.random.normal(nxt(), (k, k, cin, cout), jnp.float32) * std

    def dense_w(cin, cout):
        std = 1.0 / math.sqrt(cin)
        return jax.random.normal(nxt(), (cin, cout), jnp.float32) * std

    def bias(c):
        return jnp.zeros((c,), jnp.float32)

    params['sfe1_w'] = conv_w(1, G); params['sfe1_b'] = bias(G)
    params['sfe2_w'] = conv_w(G, G); params['sfe2_b'] = bias(G)
    for d in range(D):
        for c in range(C):
            params[f'rdb{d}_c{c}_w'] = conv_w(G + c * G, G)
            params[f'rdb{d}_c{c}_b'] = bias(G)
        params[f'rdb{d}_lff_w'] = dense_w(G + C * G, G)   # 1x1 conv == dense
        params[f'rdb{d}_lff_b'] = bias(G)
    params['gff1_w'] = dense_w(D * G, G); params['gff1_b'] = bias(G)
    params['gff2_w'] = conv_w(G, G); params['gff2_b'] = bias(G)
    params['p2w_w1'] = dense_w(3, 256); params['p2w_b1'] = bias(256)
    params['p2w_w2'] = dense_w(256, 3 * 3 * G * 1); params['p2w_b2'] = bias(9 * G)
    return params


# ----------------------------------------------------------------------------
# Forward pass (semantics of MetaRDN.forward)
# ----------------------------------------------------------------------------
def metardn_forward(params, x_nchw, pose_mat, scale, D, C, G):
    s = int(math.ceil(scale))
    N, _, H, W = x_nchw.shape
    x = jnp.transpose(x_nchw, (0, 2, 3, 1)).astype(jnp.float32)   # -> NHWC

    f1 = conv3x3(x, params['sfe1_w'], params['sfe1_b'])
    x = conv3x3(f1, params['sfe2_w'], params['sfe2_b'])

    rdb_outs = []
    for d in range(D):
        res = x
        cur = x
        for c in range(C):
            out = conv3x3(cur, params[f'rdb{d}_c{c}_w'],
                          params[f'rdb{d}_c{c}_b'], relu=True)
            cur = jnp.concatenate([cur, out], axis=-1)    # torch.cat((x,out),1)
        x = conv1x1(cur, params[f'rdb{d}_lff_w'], params[f'rdb{d}_lff_b']) + res
        rdb_outs.append(x)

    cat = jnp.concatenate(rdb_outs, axis=-1)              # torch.cat(RDBs_out,1)
    x = conv1x1(cat, params['gff1_w'], params['gff1_b'])
    x = conv3x3(x, params['gff2_w'], params['gff2_b'])
    x = x + f1                                            # (N, H, W, G)

    # --- Pos2Weight ---
    P = pose_mat.shape[1]
    pose = pose_mat.reshape(P, pose_mat.shape[-1])        # pose_mat.view(P,-1)
    h = dense(pose, params['p2w_w1'], params['p2w_b1'], relu=True)
    lw = dense(h, params['p2w_w2'], params['p2w_b2'])     # (P, 9*G)

    # --- fused unfold + per-pixel matmul (cols never materialized) ---
    out = meta_upsample(x, lw, s)                         # (N, s^2, H, W) f32

    # --- pixel-shuffle style reassembly to (N, 1, s*H, s*W) ---
    out = out.reshape(N, s, s, H, W)                      # (n, si_h, si_w, h, w)
    out = jnp.transpose(out, (0, 3, 1, 4, 2)).reshape(N, 1, H * s, W * s)
    return out


# ----------------------------------------------------------------------------
if __name__ == "__main__":
    # Small config consistent with the module (D/C/G are ctor args).
    D, C, G = 2, 2, 32
    N, H, W = 1, 8, 8
    scale = 2.0
    s = math.ceil(scale)

    key = jax.random.PRNGKey(0)
    kx, kp, kw = jax.random.split(key, 3)

    x = jax.random.normal(kx, (N, 1, H, W), jnp.float32)          # NCHW input
    pose_mat = jax.random.uniform(kp, (1, H * s * W * s, 3), jnp.float32)
    params = init_params(kw, D, C, G)

    out = metardn_forward(params, x, pose_mat, scale, D, C, G)
    out = jax.block_until_ready(out)
    assert out.shape == (N, 1, s * H, s * W), out.shape
    assert jnp.all(jnp.isfinite(out))
    print("KERNEL_OK")
</pallas_src>

<mosaic_0001>
module attributes {stable_mosaic.version = 11 : i64} {
  func.func @_conv3x3_kernel(%arg0: i32, %arg1: memref<1x10x10x1xbf16, #tpu.memory_space<vmem>>, %arg2: memref<9x32xbf16, #tpu.memory_space<vmem>>, %arg3: memref<1x32xf32, #tpu.memory_space<vmem>>, %arg4: memref<1x64x32xbf16, #tpu.memory_space<vmem>>) attributes {dimension_semantics = [#tpu.dimension_semantics<parallel>], iteration_bounds = array<i64: 1>, scalar_prefetch = 0 : i64, scratch_operands = 0 : i64, tpu.core_type = #tpu.core_type<tc>, window_params = [{transform_indices = @transform_0, window_bounds = array<i64: 1, 10, 10, 1>}, {pipeline_mode = #tpu.pipeline_mode<synchronous>, transform_indices = @transform_1, window_bounds = array<i64: 9, 32>}, {pipeline_mode = #tpu.pipeline_mode<synchronous>, transform_indices = @transform_2, window_bounds = array<i64: 1, 32>}, {transform_indices = @transform_3, window_bounds = array<i64: 1, 64, 32>}]} {
    %c0 = arith.constant 0 : index
    %c0_0 = arith.constant 0 : index
    %c0_1 = arith.constant 0 : index
    %c0_2 = arith.constant 0 : index
    %0 = vector.load %arg1[%c0, %c0_0, %c0_1, %c0_2] : memref<1x10x10x1xbf16, #tpu.memory_space<vmem>>, vector<1x10x10x1xbf16>
    %1 = vector.shape_cast %0 : vector<1x10x10x1xbf16> to vector<10x10x1xbf16>
    %2 = vector.extract_strided_slice %1 {offsets = [0, 0, 0], sizes = [8, 8, 1], strides = [1, 1, 1]} : vector<10x10x1xbf16> to vector<8x8x1xbf16>
    %3 = vector.extract_strided_slice %1 {offsets = [0, 1, 0], sizes = [8, 8, 1], strides = [1, 1, 1]} : vector<10x10x1xbf16> to vector<8x8x1xbf16>
    %4 = vector.extract_strided_slice %1 {offsets = [0, 2, 0], sizes = [8, 8, 1], strides = [1, 1, 1]} : vector<10x10x1xbf16> to vector<8x8x1xbf16>
    %5 = vector.extract_strided_slice %1 {offsets = [1, 0, 0], sizes = [8, 8, 1], strides = [1, 1, 1]} : vector<10x10x1xbf16> to vector<8x8x1xbf16>
    %6 = vector.extract_strided_slice %1 {offsets = [1, 1, 0], sizes = [8, 8, 1], strides = [1, 1, 1]} : vector<10x10x1xbf16> to vector<8x8x1xbf16>
    %7 = vector.extract_strided_slice %1 {offsets = [1, 2, 0], sizes = [8, 8, 1], strides = [1, 1, 1]} : vector<10x10x1xbf16> to vector<8x8x1xbf16>
    %8 = vector.extract_strided_slice %1 {offsets = [2, 0, 0], sizes = [8, 8, 1], strides = [1, 1, 1]} : vector<10x10x1xbf16> to vector<8x8x1xbf16>
    %9 = vector.extract_strided_slice %1 {offsets = [2, 1, 0], sizes = [8, 8, 1], strides = [1, 1, 1]} : vector<10x10x1xbf16> to vector<8x8x1xbf16>
    %10 = vector.extract_strided_slice %1 {offsets = [2, 2, 0], sizes = [8, 8, 1], strides = [1, 1, 1]} : vector<10x10x1xbf16> to vector<8x8x1xbf16>
    %11 = tpu.concatenate %2, %3, %4, %5, %6, %7, %8, %9, %10 in 2 : vector<8x8x1xbf16>, vector<8x8x1xbf16>, vector<8x8x1xbf16>, vector<8x8x1xbf16>, vector<8x8x1xbf16>, vector<8x8x1xbf16>, vector<8x8x1xbf16>, vector<8x8x1xbf16>, vector<8x8x1xbf16> -> vector<8x8x9xbf16>
    %12 = vector.shape_cast %11 : vector<8x8x9xbf16> to vector<64x9xbf16>
    %c0_3 = arith.constant 0 : index
    %c0_4 = arith.constant 0 : index
    %13 = vector.load %arg2[%c0_3, %c0_4] : memref<9x32xbf16, #tpu.memory_space<vmem>>, vector<9x32xbf16>
    %cst = arith.constant dense<0.000000e+00> : vector<64x32xf32>
    %14 = tpu.matmul %12, %13, %cst {dimension_numbers = #tpu.dot_dimension_numbers<[1], [0], [0], [1], [0, 0, 1, 1], [], []>} : vector<64x9xbf16>, vector<9x32xbf16>, vector<64x32xf32> -> vector<64x32xf32>
    %c0_5 = arith.constant 0 : index
    %c0_6 = arith.constant 0 : index
    %15 = vector.load %arg3[%c0_5, %c0_6] : memref<1x32xf32, #tpu.memory_space<vmem>>, vector<1x32xf32>
    %16 = vector.broadcast %15 : vector<1x32xf32> to vector<64x32xf32>
    %17 = arith.addf %14, %16 : vector<64x32xf32>
    %18 = arith.truncf %17 : vector<64x32xf32> to vector<64x32xbf16>
    %c0_7 = arith.constant 0 : index
    %c0_8 = arith.constant 0 : index
    %c0_9 = arith.constant 0 : index
    %19 = vector.load %arg4[%c0_7, %c0_8, %c0_9] : memref<1x64x32xbf16, #tpu.memory_space<vmem>>, vector<1x64x32xbf16>
    %20 = vector.shape_cast %19 : vector<1x64x32xbf16> to vector<64x32xbf16>
    %21 = vector.shape_cast %18 : vector<64x32xbf16> to vector<1x64x32xbf16>
    tpu.vector_store %arg4[%c0_7, %c0_8, %c0_9], %21 {strides = array<i32>} : memref<1x64x32xbf16, #tpu.memory_space<vmem>>, vector<1x64x32xbf16>,
    return
  }
  func.func @transform_0(%arg0: i32) -> (i32, i32, i32, i32) {
    %c0_i32 = arith.constant 0 : i32
    %c0_i32_0 = arith.constant 0 : i32
    %c0_i32_1 = arith.constant 0 : i32
    %c0_i32_2 = arith.constant 0 : i32
    return %arg0, %c0_i32, %c0_i32_0, %c0_i32_1 : i32, i32, i32, i32
  }
  func.func @transform_1(%arg0: i32) -> (i32, i32) {
    %c0_i32 = arith.constant 0 : i32
    %c0_i32_0 = arith.constant 0 : i32
    %c0_i32_1 = arith.constant 0 : i32
    return %c0_i32, %c0_i32_0 : i32, i32
  }
  func.func @transform_2(%arg0: i32) -> (i32, i32) {
    %c0_i32 = arith.constant 0 : i32
    %c0_i32_0 = arith.constant 0 : i32
    %c0_i32_1 = arith.constant 0 : i32
    return %c0_i32, %c0_i32_0 : i32, i32
  }
  func.func @transform_3(%arg0: i32) -> (i32, i32, i32) {
    %c0_i32 = arith.constant 0 : i32
    %c0_i32_0 = arith.constant 0 : i32
    %c0_i32_1 = arith.constant 0 : i32
    return %arg0, %c0_i32, %c0_i32_0 : i32, i32, i32
  }
}

</mosaic_0001>

<llo_original>
// kernel: tpu_custom_call.1
$region0: #{tpu_custom_call.1}
  #allocation0 [shape = 'u32[]', space=smem, size = 0x4, offset = 0x4, fixed_abs, tag = 'smem constant byte address 0x4 - core index']
  #allocation1 [shape = 'u32[144,128]{1,0:T(1,128)}', space=vmem, size = 0x12000, scoped, tag = 'internal scratch']
  %s0 = inlined_call_operand.vmem [shape: bf16[1,10,10,1], index: 0, kind: input, shape index: {}]
  %s1 = inlined_call_operand.vmem [shape: bf16[9,32], index: 1, kind: input, shape index: {}]
  %s2 = inlined_call_operand.vmem [shape: f32[1,32], index: 2, kind: input, shape index: {}]
  %s3 = inlined_call_operand.vmem [shape: bf16[1,64,32], index: 3, kind: output, shape index: {}]
  %s4 = sld [smem:[#allocation0]]
  $region22: #{tpu_custom_call.1} parent=0
    _
  %s6 = ssub.s32 1, %s4
  %s7 = scalar_select 0, %s6, %s4
  // Predicated region
  $region2: #{tpu_custom_call.1} parent=0 // pred_check
    _
  $region3: #{tpu_custom_call.1} parent=0 // pred_check_branch
    %9 = sbr.rel (0) target = $region5
  $region4: #{tpu_custom_call.1} parent=0 // pred_region
    _
  $region5: #{tpu_custom_call.1} parent=0 // pred_fallthru
    _
  // Predicated region
  $region6: #{tpu_custom_call.1} parent=0 // pred_check
    _
  $region7: #{tpu_custom_call.1} parent=0 // pred_check_branch
    %11 = sbr.rel (0) target = $region9
  $region8: #{tpu_custom_call.1} parent=0 // pred_region
    _
  $region9: #{tpu_custom_call.1} parent=0 // pred_fallthru
    _
  // Predicated region
  $region10: #{tpu_custom_call.1} parent=0 // pred_check
    _
  $region11: #{tpu_custom_call.1} parent=0 // pred_check_branch
    %13 = sbr.rel (0) target = $region13
  $region12: #{tpu_custom_call.1} parent=0 // pred_region
    _
  $region13: #{tpu_custom_call.1} parent=0 // pred_fallthru
    _
  %v15 = vld [vmem:[%s0] sm:$0xf]
  %v16 = vld [vmem:[%s0 + $0x4] sm:$0x1]
  %v17 = vld [vmem:[%s0 + $0x8] sm:$0xf]
  %v18 = vld [vmem:[%s0 + $0xc] sm:$0x1]
  %v19 = vld [vmem:[%s0 + $0x10] sm:$0xf]
  %v20 = vld [vmem:[%s0 + $0x14] sm:$0x1]
  %v21 = vld [vmem:[%s0 + $0x18] sm:$0xf]
  %v22 = vld [vmem:[%s0 + $0x1c] sm:$0x1]
  %v23 = vld [vmem:[%s0 + $0x20] sm:$0xf]
  %v24 = vld [vmem:[%s0 + $0x24] sm:$0x1]
  %v25 = vld [vmem:[%s0 + $0x28] sm:$0xf]
  %v26 = vld [vmem:[%s0 + $0x2c] sm:$0x1]
  %v27 = vld [vmem:[%s0 + $0x30] sm:$0xf]
  %v28 = vld [vmem:[%s0 + $0x34] sm:$0x1]
  %v29 = vld [vmem:[%s0 + $0x38] sm:$0xf]
  %v30 = vld [vmem:[%s0 + $0x3c] sm:$0x1]
  %v31 = vld [vmem:[%s0 + $0x40] sm:$0xf]
  %v32 = vld [vmem:[%s0 + $0x44] sm:$0x1]
  %v33 = vld [vmem:[%s0 + $0x48] sm:$0xf]
  %v34 = vld [vmem:[%s0 + $0x4c] sm:$0x1]
  %v51 = vunpack.c.l.b16 %v15
  %v52 = vunpack.c.l.b16 %v16
  %v53 = vunpack.c.l.b16 %v17
  %v54 = vunpack.c.l.b16 %v18
  %v55 = vunpack.c.l.b16 %v19
  %v56 = vunpack.c.l.b16 %v20
  %v57 = vunpack.c.l.b16 %v21
  %v58 = vunpack.c.l.b16 %v22
  %v59 = vunpack.c.l.b16 %v23
  %v60 = vunpack.c.l.b16 %v24
  %v61 = vunpack.c.l.b16 %v25
  %v62 = vunpack.c.l.b16 %v26
  %v63 = vunpack.c.l.b16 %v27
  %v64 = vunpack.c.l.b16 %v28
  %v65 = vunpack.c.l.b16 %v29
  %v66 = vunpack.c.l.b16 %v30
  %v67 = vpack.c.b16 %v52, %v51
  %v68 = vpack.c.b16 %v54, %v53
  %v69 = vpack.c.b16 %v56, %v55
  %v70 = vpack.c.b16 %v58, %v57
  %v71 = vpack.c.b16 %v60, %v59
  %v72 = vpack.c.b16 %v62, %v61
  %v73 = vpack.c.b16 %v64, %v63
  %v74 = vpack.c.b16 %v66, %v65
  %v76 = vshrl.u32 %v67, 16
  %v78 = vshll.u32 %v67, 16
  %v80 = vrot.slane %v78, 1
  %v81 = vor.u32 %v76, %v80
  %v83 = vshrl.u32 %v68, 16
  %v85 = vshll.u32 %v68, 16
  %v87 = vrot.slane %v85, 1
  %v88 = vor.u32 %v83, %v87
  %v90 = vshrl.u32 %v69, 16
  %v92 = vshll.u32 %v69, 16
  %v94 = vrot.slane %v92, 1
  %v95 = vor.u32 %v90, %v94
  %v97 = vshrl.u32 %v70, 16
  %v99 = vshll.u32 %v70, 16
  %v101 = vrot.slane %v99, 1
  %v102 = vor.u32 %v97, %v101
  %v104 = vshrl.u32 %v71, 16
  %v106 = vshll.u32 %v71, 16
  %v108 = vrot.slane %v106, 1
  %v109 = vor.u32 %v104, %v108
  %v111 = vshrl.u32 %v72, 16
  %v113 = vshll.u32 %v72, 16
  %v115 = vrot.slane %v113, 1
  %v116 = vor.u32 %v111, %v115
  %v118 = vshrl.u32 %v73, 16
  %v120 = vshll.u32 %v73, 16
  %v122 = vrot.slane %v120, 1
  %v123 = vor.u32 %v118, %v122
  %v125 = vshrl.u32 %v74, 16
  %v127 = vshll.u32 %v74, 16
  %v129 = vrot.slane %v127, 1
  %v130 = vor.u32 %v125, %v129
  %131 = vrot.lane.b32.xlu0 %v81, 1
  %v132 = vpop.permute.xlu0 %131
  %133 = vrot.lane.b32.xlu0 %v88, 1
  %v134 = vpop.permute.xlu0 %133
  %135 = vrot.lane.b32.xlu0 %v95, 1
  %v136 = vpop.permute.xlu0 %135
  %137 = vrot.lane.b32.xlu0 %v102, 1
  %v138 = vpop.permute.xlu0 %137
  %139 = vrot.lane.b32.xlu0 %v109, 1
  %v140 = vpop.permute.xlu0 %139
  %141 = vrot.lane.b32.xlu0 %v116, 1
  %v142 = vpop.permute.xlu0 %141
  %143 = vrot.lane.b32.xlu0 %v123, 1
  %v144 = vpop.permute.xlu0 %143
  %145 = vrot.lane.b32.xlu0 %v130, 1
  %v146 = vpop.permute.xlu0 %145
  %v147 = vrot.slane %v67, 1
  %v148 = vrot.slane %v68, 1
  %v149 = vrot.slane %v69, 1
  %v150 = vrot.slane %v70, 1
  %v151 = vrot.slane %v71, 1
  %v152 = vrot.slane %v72, 1
  %v153 = vrot.slane %v73, 1
  %v154 = vrot.slane %v74, 1
  %155 = vrot.lane.b32.xlu0 %v147, 2
  %v156 = vpop.permute.xlu0 %155
  %157 = vrot.lane.b32.xlu0 %v148, 2
  %v158 = vpop.permute.xlu0 %157
  %159 = vrot.lane.b32.xlu0 %v149, 2
  %v160 = vpop.permute.xlu0 %159
  %161 = vrot.lane.b32.xlu0 %v150, 2
  %v162 = vpop.permute.xlu0 %161
  %163 = vrot.lane.b32.xlu0 %v151, 2
  %v164 = vpop.permute.xlu0 %163
  %165 = vrot.lane.b32.xlu0 %v152, 2
  %v166 = vpop.permute.xlu0 %165
  %167 = vrot.lane.b32.xlu0 %v153, 2
  %v168 = vpop.permute.xlu0 %167
  %169 = vrot.lane.b32.xlu0 %v154, 2
  %v170 = vpop.permute.xlu0 %169
  %v172 = vunpack.c.l.b16 %v31
  %v173 = vpack.c.b16 %v53, %v53
  %v174 = vpack.c.b16 %v55, %v55
  %v175 = vpack.c.b16 %v57, %v57
  %v176 = vpack.c.b16 %v59, %v59
  %v177 = vpack.c.b16 %v61, %v61
  %v178 = vpack.c.b16 %v63, %v63
  %v179 = vpack.c.b16 %v65, %v65
  %v180 = vpack.c.b16 %v172, %v172
  %181 = vrot.lane.b32.xlu0 %v173, 3
  %v182 = vpop.permute.xlu0 %181
  %183 = vrot.lane.b32.xlu0 %v174, 3
  %v184 = vpop.permute.xlu0 %183
  %185 = vrot.lane.b32.xlu0 %v175, 3
  %v186 = vpop.permute.xlu0 %185
  %187 = vrot.lane.b32.xlu0 %v176, 3
  %v188 = vpop.permute.xlu0 %187
  %189 = vrot.lane.b32.xlu0 %v177, 3
  %v190 = vpop.permute.xlu0 %189
  %191 = vrot.lane.b32.xlu0 %v178, 3
  %v192 = vpop.permute.xlu0 %191
  %193 = vrot.lane.b32.xlu0 %v179, 3
  %v194 = vpop.permute.xlu0 %193
  %195 = vrot.lane.b32.xlu0 %v180, 3
  %v196 = vpop.permute.xlu0 %195
  %v198 = vunpack.c.l.b16 %v32
  %v199 = vpack.c.b16 %v198, %v172
  %v201 = vshrl.u32 %v199, 16
  %v203 = vshll.u32 %v199, 16
  %v205 = vrot.slane %v203, 1
  %v206 = vor.u32 %v201, %v205
  %207 = vrot.lane.b32.xlu0 %v88, 4
  %v208 = vpop.permute.xlu0 %207
  %209 = vrot.lane.b32.xlu0 %v95, 4
  %v210 = vpop.permute.xlu0 %209
  %211 = vrot.lane.b32.xlu0 %v102, 4
  %v212 = vpop.permute.xlu0 %211
  %213 = vrot.lane.b32.xlu0 %v109, 4
  %v214 = vpop.permute.xlu0 %213
  %215 = vrot.lane.b32.xlu0 %v116, 4
  %v216 = vpop.permute.xlu0 %215
  %217 = vrot.lane.b32.xlu0 %v123, 4
  %v218 = vpop.permute.xlu0 %217
  %219 = vrot.lane.b32.xlu0 %v130, 4
  %v220 = vpop.permute.xlu0 %219
  %221 = vrot.lane.b32.xlu0 %v206, 4
  %v222 = vpop.permute.xlu0 %221
  %v223 = vrot.slane %v199, 1
  %224 = vrot.lane.b32.xlu0 %v148, 5
  %v225 = vpop.permute.xlu0 %224
  %226 = vrot.lane.b32.xlu0 %v149, 5
  %v227 = vpop.permute.xlu0 %226
  %228 = vrot.lane.b32.xlu0 %v150, 5
  %v229 = vpop.permute.xlu0 %228
  %230 = vrot.lane.b32.xlu0 %v151, 5
  %v231 = vpop.permute.xlu0 %230
  %232 = vrot.lane.b32.xlu0 %v152, 5
  %v233 = vpop.permute.xlu0 %232
  %234 = vrot.lane.b32.xlu0 %v153, 5
  %v235 = vpop.permute.xlu0 %234
  %236 = vrot.lane.b32.xlu0 %v154, 5
  %v237 = vpop.permute.xlu0 %236
  %238 = vrot.lane.b32.xlu0 %v223, 5
  %v239 = vpop.permute.xlu0 %238
  %v241 = vunpack.c.l.b16 %v33
  %v242 = vpack.c.b16 %v241, %v241
  %243 = vrot.lane.b32.xlu0 %v174, 6
  %v244 = vpop.permute.xlu0 %243
  %245 = vrot.lane.b32.xlu0 %v175, 6
  %v246 = vpop.permute.xlu0 %245
  %247 = vrot.lane.b32.xlu0 %v176, 6
  %v248 = vpop.permute.xlu0 %247
  %249 = vrot.lane.b32.xlu0 %v177, 6
  %v250 = vpop.permute.xlu0 %249
  %251 = vrot.lane.b32.xlu0 %v178, 6
  %v252 = vpop.permute.xlu0 %251
  %253 = vrot.lane.b32.xlu0 %v179, 6
  %v254 = vpop.permute.xlu0 %253
  %255 = vrot.lane.b32.xlu0 %v180, 6
  %v256 = vpop.permute.xlu0 %255
  %257 = vrot.lane.b32.xlu0 %v242, 6
  %v258 = vpop.permute.xlu0 %257
  %v260 = vunpack.c.l.b16 %v34
  %v261 = vpack.c.b16 %v260, %v241
  %v263 = vshrl.u32 %v261, 16
  %v265 = vshll.u32 %v261, 16
  %v267 = vrot.slane %v265, 1
  %v268 = vor.u32 %v263, %v267
  %269 = vrot.lane.b32.xlu0 %v95, 7
  %v270 = vpop.permute.xlu0 %269
  %271 = vrot.lane.b32.xlu0 %v102, 7
  %v272 = vpop.permute.xlu0 %271
  %273 = vrot.lane.b32.xlu0 %v109, 7
  %v274 = vpop.permute.xlu0 %273
  %275 = vrot.lane.b32.xlu0 %v116, 7
  %v276 = vpop.permute.xlu0 %275
  %277 = vrot.lane.b32.xlu0 %v123, 7
  %v278 = vpop.permute.xlu0 %277
  %279 = vrot.lane.b32.xlu0 %v130, 7
  %v280 = vpop.permute.xlu0 %279
  %281 = vrot.lane.b32.xlu0 %v206, 7
  %v282 = vpop.permute.xlu0 %281
  %283 = vrot.lane.b32.xlu0 %v268, 7
  %v284 = vpop.permute.xlu0 %283
  %v285 = vrot.slane %v261, 1
  %286 = vrot.lane.b32.xlu0 %v149, 8
  %v287 = vpop.permute.xlu0 %286
  %288 = vrot.lane.b32.xlu0 %v150, 8
  %v289 = vpop.permute.xlu0 %288
  %290 = vrot.lane.b32.xlu0 %v151, 8
  %v291 = vpop.permute.xlu0 %290
  %292 = vrot.lane.b32.xlu0 %v152, 8
  %v293 = vpop.permute.xlu0 %292
  %294 = vrot.lane.b32.xlu0 %v153, 8
  %v295 = vpop.permute.xlu0 %294
  %296 = vrot.lane.b32.xlu0 %v154, 8
  %v297 = vpop.permute.xlu0 %296
  %298 = vrot.lane.b32.xlu0 %v223, 8
  %v299 = vpop.permute.xlu0 %298
  %300 = vrot.lane.b32.xlu0 %v285, 8
  %v301 = vpop.permute.xlu0 %300
  %vm302 = vcmask 7168
  %v305 = vsel %vm302, %v15, %v132
  %v308 = vsel %vm302, %v17, %v134
  %v311 = vsel %vm302, %v19, %v136
  %v314 = vsel %vm302, %v21, %v138
  %v317 = vsel %vm302, %v23, %v140
  %v320 = vsel %vm302, %v25, %v142
  %v323 = vsel %vm302, %v27, %v144
  %v326 = vsel %vm302, %v29, %v146
  %vm327 = vcmask 15360
  %v329 = vsel %vm327, %v305, %v156
  %v331 = vsel %vm327, %v308, %v158
  %v333 = vsel %vm327, %v311, %v160
  %v335 = vsel %vm327, %v314, %v162
  %v337 = vsel %vm327, %v317, %v164
  %v339 = vsel %vm327, %v320, %v166
  %v341 = vsel %vm327, %v323, %v168
  %v343 = vsel %vm327, %v326, %v170
  %vm344 = vcmask 23552
  %v346 = vsel %vm344, %v329, %v182
  %v348 = vsel %vm344, %v331, %v184
  %v350 = vsel %vm344, %v333, %v186
  %v352 = vsel %vm344, %v335, %v188
  %v354 = vsel %vm344, %v337, %v190
  %v356 = vsel %vm344, %v339, %v192
  %v358 = vsel %vm344, %v341, %v194
  %v360 = vsel %vm344, %v343, %v196
  %vm361 = vcmask 31744
  %v363 = vsel %vm361, %v346, %v208
  %v365 = vsel %vm361, %v348, %v210
  %v367 = vsel %vm361, %v350, %v212
  %v369 = vsel %vm361, %v352, %v214
  %v371 = vsel %vm361, %v354, %v216
  %v373 = vsel %vm361, %v356, %v218
  %v375 = vsel %vm361, %v358, %v220
  %v377 = vsel %vm361, %v360, %v222
  %vm378 = vcmask 39936
  %v380 = vsel %vm378, %v363, %v225
  %v382 = vsel %vm378, %v365, %v227
  %v384 = vsel %vm378, %v367, %v229
  %v386 = vsel %vm378, %v369, %v231
  %v388 = vsel %vm378, %v371, %v233
  %v390 = vsel %vm378, %v373, %v235
  %v392 = vsel %vm378, %v375, %v237
  %v394 = vsel %vm378, %v377, %v239
  %vm395 = vcmask 48128
  %v397 = vsel %vm395, %v380, %v244
  %v399 = vsel %vm395, %v382, %v246
  %v401 = vsel %vm395, %v384, %v248
  %v403 = vsel %vm395, %v386, %v250
  %v405 = vsel %vm395, %v388, %v252
  %v407 = vsel %vm395, %v390, %v254
  %v409 = vsel %vm395, %v392, %v256
  %v411 = vsel %vm395, %v394, %v258
  %vm412 = vcmask 56320
  %v414 = vsel %vm412, %v397, %v270
  %v416 = vsel %vm412, %v399, %v272
  %v418 = vsel %vm412, %v401, %v274
  %v420 = vsel %vm412, %v403, %v276
  %v422 = vsel %vm412, %v405, %v278
  %v424 = vsel %vm412, %v407, %v280
  %v426 = vsel %vm412, %v409, %v282
  %v428 = vsel %vm412, %v411, %v284
  %vm429 = vcmask 64512
  %v431 = vsel %vm429, %v414, %v287
  %v433 = vsel %vm429, %v416, %v289
  %v435 = vsel %vm429, %v418, %v291
  %v437 = vsel %vm429, %v420, %v293
  %v439 = vsel %vm429, %v422, %v295
  %v441 = vsel %vm429, %v424, %v297
  %v443 = vsel %vm429, %v426, %v299
  %v445 = vsel %vm429, %v428, %v301
  %v446 = vld [vmem:[%s1] sm:$0xf]
  %v447 = vld [vmem:[%s1 + $0x4] sm:$0x1]
  %v448 = vld [vmem:[%s2] sm:$0x1]
  %v450 = vlaneseq
  %v451 = vshrl.u32 %v450, 7
  %v452 = vsub.s32 0, %v451
  %v453 = vrot.slane %v448, %v452
  %v463 = vunpack.c.l.b16 %v431
  %v464 = vunpack.c.l.b16 %v433
  %v465 = vunpack.c.l.b16 %v435
  %v466 = vunpack.c.l.b16 %v437
  %v467 = vunpack.c.l.b16 %v439
  %v468 = vunpack.c.l.b16 %v441
  %v469 = vunpack.c.l.b16 %v443
  %v470 = vunpack.c.l.b16 %v445
  %v471 = vpack.c.b16 %v464, %v463
  %v472 = vpack.c.b16 %v466, %v465
  %v473 = vpack.c.b16 %v468, %v467
  %v474 = vpack.c.b16 %v470, %v469
  %v477 = vunpack.c.l.b16 %v446
  %v478 = vunpack.c.l.b16 %v447
  %v479 = vpack.c.b16 %v478, %v477
  %vm480 = vcmask 72704
  %v482 = vsel %vm480, %v471, 0
  %v485 = vsel %vm480, %v472, 0
  %v488 = vsel %vm480, %v473, 0
  %v491 = vsel %vm480, %v474, 0
  %vm493 = vcmask 1043456
  %vm494 = vcmask 1044480
  %v495 = vsel %vm493, 4294967295, 65535
  %v496 = vsel %vm494, %v495, 0
  %v498 = vand.u32 %v479, %v496
  %500 = vmatprep.subr.bf16.mxu0 0
  %501 = vmatpush1.bf16.msra.mxu0 %v498
  %502 = vmatprep.subr.bf16.mxu0 0
  %503 = vmatpush1.bf16.msra.mxu0 0
  %504 = vmatprep.subr.bf16.mxu0 0
  %505 = vmatpush1.bf16.msra.mxu0 0
  %506 = vmatprep.subr.bf16.mxu0 0
  %507 = vmatpush1.bf16.msra.mxu0 0
  %508 = vmatprep.subr.bf16.mxu0 0
  %509 = vmatpush1.bf16.msra.mxu0 0
  %510 = vmatprep.subr.bf16.mxu0 0
  %511 = vmatpush1.bf16.msra.mxu0 0
  %512 = vmatprep.subr.bf16.mxu0 0
  %513 = vmatpush1.bf16.msra.mxu0 0
  %514 = vmatprep.subr.bf16.mxu0 0
  %515 = vmatpush1.bf16.msra.mxu0 0
  %516 = vmatprep.subr.bf16.mxu0 0
  %517 = vmatpush1.bf16.msra.mxu0 0
  %518 = vmatprep.subr.bf16.mxu0 0
  %519 = vmatpush1.bf16.msra.mxu0 0
  %520 = vmatprep.subr.bf16.mxu0 0
  %521 = vmatpush1.bf16.msra.mxu0 0
  %522 = vmatprep.subr.bf16.mxu0 0
  %523 = vmatpush1.bf16.msra.mxu0 0
  %524 = vmatprep.subr.bf16.mxu0 0
  %525 = vmatpush1.bf16.msra.mxu0 0
  %526 = vmatprep.subr.bf16.mxu0 0
  %527 = vmatpush1.bf16.msra.mxu0 0
  %528 = vmatprep.subr.bf16.mxu0 0
  %529 = vmatpush1.bf16.msra.mxu0 0
  %530 = vmatprep.subr.bf16.mxu0 0
  %531 = vmatpush1.bf16.msra.mxu0 0
  %532 = vmatprep.mubr.bf16.mxu0 0
  %533 = vmatmul.mubr.bf16.gmra.mrb[0].mxu0 %v482
  %v534 = vpop.f32.mrb[0].mxu0
  %v535 = vadd.f32 %v453, %v534
  %v536 = vpop.f32.mrb[0].mxu0
  %v537 = vpop.f32.mrb[0].mxu0
  %v538 = vadd.f32 %v453, %v537
  %v539 = vpop.f32.mrb[0].mxu0
  %540 = vmatprep.mubr.bf16.mxu0 0
  %541 = vmatmul.mubr.bf16.gmra.mrb[0].mxu0 %v485
  %v542 = vpop.f32.mrb[0].mxu0
  %v543 = vadd.f32 %v453, %v542
  %v544 = vpop.f32.mrb[0].mxu0
  %v545 = vpop.f32.mrb[0].mxu0
  %v546 = vadd.f32 %v453, %v545
  %v547 = vpop.f32.mrb[0].mxu0
  %548 = vmatprep.mubr.bf16.mxu0 0
  %549 = vmatmul.mubr.bf16.gmra.mrb[0].mxu0 %v488
  %v550 = vpop.f32.mrb[0].mxu0
  %v551 = vadd.f32 %v453, %v550
  %v552 = vpop.f32.mrb[0].mxu0
  %v553 = vpop.f32.mrb[0].mxu0
  %v554 = vadd.f32 %v453, %v553
  %v555 = vpop.f32.mrb[0].mxu0
  %556 = vmatprep.mubr.bf16.mxu0 0
  %557 = vmatmul.mubr.bf16.gmra.mrb[0].mxu0 %v491
  %v558 = vpop.f32.mrb[0].mxu0
  %v559 = vadd.f32 %v453, %v558
  %v560 = vpop.f32.mrb[0].mxu0
  %v561 = vpop.f32.mrb[0].mxu0
  %v562 = vadd.f32 %v453, %v561
  %v563 = vpop.f32.mrb[0].mxu0
  %564 = vdwg.mxu0
  %v565 = vpack.c.bf16 %v538, %v535
  %v566 = vpack.c.bf16 %v546, %v543
  %v567 = vpack.c.bf16 %v554, %v551
  %v568 = vpack.c.bf16 %v562, %v559
  %v573 = vunpack.c.l.b16 %v565
  %v574 = vunpack.c.h.b16 %v565
  %v575 = vunpack.c.l.b16 %v566
  %v576 = vunpack.c.h.b16 %v566
  %v577 = vunpack.c.l.b16 %v567
  %v578 = vunpack.c.h.b16 %v567
  %v579 = vunpack.c.l.b16 %v568
  %v580 = vunpack.c.h.b16 %v568
  %v581 = vpack.c.b16 %v573, %v573
  %v582 = vpack.c.b16 %v574, %v574
  %v583 = vpack.c.b16 %v575, %v575
  %v584 = vpack.c.b16 %v576, %v576
  %v585 = vpack.c.b16 %v577, %v577
  %v586 = vpack.c.b16 %v578, %v578
  %v587 = vpack.c.b16 %v579, %v579
  %v588 = vpack.c.b16 %v580, %v580
  %vm597 = vcmask 257024
  %598 = vst.msk [vmem:[%s3] sm:$0xf] %vm597, %v581
  %599 = vst.msk [vmem:[%s3 + $0x4] sm:$0xf] %vm597, %v582
  %600 = vst.msk [vmem:[%s3 + $0x8] sm:$0xf] %vm597, %v583
  %601 = vst.msk [vmem:[%s3 + $0xc] sm:$0xf] %vm597, %v584
  %602 = vst.msk [vmem:[%s3 + $0x10] sm:$0xf] %vm597, %v585
  %603 = vst.msk [vmem:[%s3 + $0x14] sm:$0xf] %vm597, %v586
  %604 = vst.msk [vmem:[%s3 + $0x18] sm:$0xf] %vm597, %v587
  %605 = vst.msk [vmem:[%s3 + $0x1c] sm:$0xf] %vm597, %v588
  // Predicated region
  $region14: #{tpu_custom_call.1} parent=0 // pred_check
    _
  $region15: #{tpu_custom_call.1} parent=0 // pred_check_branch
    %607 = sbr.rel (0) target = $region17
  $region16: #{tpu_custom_call.1} parent=0 // pred_region
    _
  $region17: #{tpu_custom_call.1} parent=0 // pred_fallthru
    _
  // Predicated region
  $region18: #{tpu_custom_call.1} parent=0 // pred_check
    _
  $region19: #{tpu_custom_call.1} parent=0 // pred_check_branch
    %609 = sbr.rel (0) target = $region21
  $region20: #{tpu_custom_call.1} parent=0 // pred_region
    _
  $region21: #{tpu_custom_call.1} parent=0 // pred_fallthru
    _

</llo_original>
